<compile_context>
chip_gen: v7x
topology: tpu7x:2x2x1
jax: 0.10.0
libtpu: 0.0.40
codegen_flags: <defaults>
</compile_context>

<pallas_src>
import functools

import jax
import jax.numpy as jnp
from jax.experimental import pallas as pl
from jax.experimental.pallas import tpu as pltpu

LANE = 128
MAX_TILE_ROWS = 4096   # 4096 x 128 x 4B = 2 MiB per f32 input per grid step.


def _sublane_quantum(dtype):
    """Second-to-last-dim tiling quantum for a dtype (8 for f32, 16 for bf16)."""
    itemsize = jnp.dtype(dtype).itemsize
    return max(8, 32 // max(itemsize, 1))


def _pick_tile_rows(rows, max_tile_rows, quantum):
    """Pick a row-tile size.

    Prefers (a) a single full-extent block when the whole array fits, then
    (b) the largest tile <= max_tile_rows that divides `rows` exactly (no
    partial trailing block, no in-kernel mask), and only then (c) the largest
    aligned tile with a masked partial trailing block.
    """
    if rows <= max_tile_rows:
        return rows                                   # single block == full dims
    max_tile = max(quantum, (max_tile_rows // quantum) * quantum)
    min_accept = max(quantum, max_tile // 4)          # don't shrink tiles too far
    t = max_tile
    while t >= min_accept:
        if rows % t == 0:
            return t
        t -= quantum
    return max_tile                                    # partial last block, masked


def _contrastive_sum_kernel(yt_ref, yp_ref, out_ref, *,
                            margin, valid_rows, tile_rows, mask_last):
    """Accumulate per-lane partial sums of the contrastive-loss terms."""
    i = pl.program_id(0)

    @pl.when(i == 0)
    def _init():
        out_ref[...] = jnp.zeros_like(out_ref)

    yt = yt_ref[...].astype(jnp.float32)               # (tile_rows, LANE)
    yp = yp_ref[...].astype(jnp.float32)
    d = jnp.maximum(jnp.float32(margin) - yp, jnp.float32(0.0))
    sq = yp * yp
    term = sq + yt * (d * d - sq)    # == (1 - yt)*yp^2 + yt*d^2, fewer VALU ops

    def accumulate(t):
        # Per-lane partial sums: bulk of the reduce is plain vreg adds; output
        # stays lane-dense (1, 128).
        out_ref[...] += jnp.sum(t, axis=0, keepdims=True)

    if mask_last:
        # Only the (single) partial trailing block pays the mask; interior
        # steps accumulate unmasked.
        last = pl.num_programs(0) - 1

        @pl.when(i != last)
        def _hot():
            accumulate(term)

        @pl.when(i == last)
        def _boundary():
            row_ids = i * tile_rows + jax.lax.broadcasted_iota(
                jnp.int32, term.shape, 0)
            accumulate(jnp.where(row_ids < valid_rows, term, jnp.float32(0.0)))
    else:
        accumulate(term)


def contrastive_loss(y_true, y_pred, margin=1.0, *, max_tile_rows=MAX_TILE_ROWS):
    """Pallas TPU implementation of Contrastive_loss.forward."""
    assert y_true.shape == y_pred.shape
    n = y_true.size

    # Keep f32 / bf16 inputs in their native dtype (bf16 halves HBM traffic for
    # this memory-bound kernel); anything else is promoted to f32.
    def prep(x):
        x = jnp.ravel(x)
        if x.dtype not in (jnp.dtype(jnp.float32), jnp.dtype(jnp.bfloat16)):
            x = x.astype(jnp.float32)
        return x

    yt = prep(y_true)
    yp = prep(y_pred)

    # Pad only up to one lane row (<= 127 zeros). Padded zeros contribute
    # (1-0)*0^2 + 0*(...) = 0 to the sum; the mean divides by the original n.
    # When n is already a multiple of 128 the reshape below is a free bitcast.
    pad = (-n) % LANE
    if pad:
        # TODO(synk): for very large ragged inputs this jnp.pad is a full-array
        # HBM copy; a fully copy-free path would need manual DMA from 1-D HBM refs.
        yt = jnp.pad(yt, (0, pad))
        yp = jnp.pad(yp, (0, pad))
    rows = (n + pad) // LANE
    yt = yt.reshape(rows, LANE)
    yp = yp.reshape(rows, LANE)

    quantum = max(_sublane_quantum(yt.dtype), _sublane_quantum(yp.dtype))
    tile_rows = _pick_tile_rows(rows, max_tile_rows, quantum)
    num_tiles = pl.cdiv(rows, tile_rows)
    mask_last = (rows % tile_rows) != 0

    kernel = functools.partial(
        _contrastive_sum_kernel,
        margin=float(margin),
        valid_rows=rows,
        tile_rows=tile_rows,
        mask_last=mask_last,
    )

    partial_sums = pl.pallas_call(
        kernel,
        out_shape=jax.ShapeDtypeStruct((1, LANE), jnp.float32),
        grid_spec=pltpu.PrefetchScalarGridSpec(
            num_scalar_prefetch=0,
            grid=(num_tiles,),
            in_specs=[
                pl.BlockSpec((tile_rows, LANE), lambda i: (i, 0)),
                pl.BlockSpec((tile_rows, LANE), lambda i: (i, 0)),
            ],
            out_specs=pl.BlockSpec((1, LANE), lambda i: (0, 0)),
        ),
        compiler_params=pltpu.CompilerParams(
            dimension_semantics=("arbitrary",),
        ),
    )(yt, yp)

    # Final tiny cross-lane reduce + mean over the ORIGINAL element count.
    return jnp.sum(partial_sums) / jnp.float32(n)


def _reference(y_true, y_pred, margin=1.0):
    yt = jnp.ravel(y_true).astype(jnp.float32)
    yp = jnp.ravel(y_pred).astype(jnp.float32)
    return jnp.mean(
        (1.0 - yt) * jnp.square(yp)
        + yt * jnp.square(jnp.maximum(margin - yp, 0.0))
    )


if __name__ == "__main__":
    key = jax.random.PRNGKey(0)

    # (n, margin, max_tile_rows, dtype) -- small shapes consistent with the
    # module's "list of labels / predictions" forward.  Small max_tile_rows
    # values force the multi-step accumulation, the exact-division tile pick,
    # and the masked partial-trailing-block path.
    cases = [
        (300, 1.0, MAX_TILE_ROWS, jnp.float32),   # ragged n: lane pad + single full block
        (2500, 2.0, 8, jnp.float32),              # multi-step + masked partial last block
        (3072, 1.0, 16, jnp.float32),             # multi-step, tile divides rows exactly
        (2048, 1.0, MAX_TILE_ROWS, jnp.float32),  # n % 128 == 0: zero-copy path
        (4096, 0.5, MAX_TILE_ROWS, jnp.bfloat16), # bf16 inputs kept native in HBM
    ]

    for n, margin, mtr, dt in cases:
        key, k1, k2 = jax.random.split(key, 3)
        y_true = jax.random.bernoulli(k1, p=0.5, shape=(n,)).astype(dt)
        y_pred = (jax.random.uniform(k2, shape=(n,), dtype=jnp.float32) * 2.0).astype(dt)

        out = contrastive_loss(y_true, y_pred, margin=margin, max_tile_rows=mtr)
        out = jax.block_until_ready(out)

        ref = _reference(y_true, y_pred, margin=margin)
        assert jnp.allclose(out, ref, rtol=1e-5, atol=1e-6), (n, margin, dt, out, ref)

    print("KERNEL_OK")
</pallas_src>

<mosaic_0001>
module attributes {stable_mosaic.version = 11 : i64} {
  func.func @_contrastive_sum_kernel(%arg0: i32, %arg1: memref<3x128xf32, #tpu.memory_space<vmem>>, %arg2: memref<3x128xf32, #tpu.memory_space<vmem>>, %arg3: memref<1x128xf32, #tpu.memory_space<vmem>>) attributes {dimension_semantics = [#tpu.dimension_semantics<arbitrary>], iteration_bounds = array<i64: 1>, scalar_prefetch = 0 : i64, scratch_operands = 0 : i64, tpu.core_type = #tpu.core_type<tc>, window_params = [{transform_indices = @transform_0, window_bounds = array<i64: 3, 128>}, {transform_indices = @transform_1, window_bounds = array<i64: 3, 128>}, {pipeline_mode = #tpu.pipeline_mode<synchronous>, transform_indices = @transform_2, window_bounds = array<i64: 1, 128>}]} {
    %c0_i32 = arith.constant 0 : i32
    %0 = arith.cmpi eq, %arg0, %c0_i32 : i32
    %1 = arith.extui %0 : i1 to i32
    %c0_i32_0 = arith.constant 0 : i32
    %2 = arith.cmpi ne, %1, %c0_i32_0 : i32
    scf.if %2 {
      %cst_10 = arith.constant 0.000000e+00 : f32
      %19 = vector.broadcast %cst_10 : f32 to vector<1x128xf32>
      %c0_11 = arith.constant 0 : index
      %c0_12 = arith.constant 0 : index
      %20 = vector.load %arg3[%c0_11, %c0_12] : memref<1x128xf32, #tpu.memory_space<vmem>>, vector<1x128xf32>
      tpu.vector_store %arg3[%c0_11, %c0_12], %19 {strides = array<i32>} : memref<1x128xf32, #tpu.memory_space<vmem>>, vector<1x128xf32>,
    } else {
    }
    %c0 = arith.constant 0 : index
    %c0_1 = arith.constant 0 : index
    %3 = vector.load %arg1[%c0, %c0_1] : memref<3x128xf32, #tpu.memory_space<vmem>>, vector<3x128xf32>
    %c0_2 = arith.constant 0 : index
    %c0_3 = arith.constant 0 : index
    %4 = vector.load %arg2[%c0_2, %c0_3] : memref<3x128xf32, #tpu.memory_space<vmem>>, vector<3x128xf32>
    %cst = arith.constant 1.000000e+00 : f32
    %5 = vector.broadcast %cst : f32 to vector<3x128xf32>
    %6 = arith.subf %5, %4 : vector<3x128xf32>
    %cst_4 = arith.constant 0.000000e+00 : f32
    %7 = vector.broadcast %cst_4 : f32 to vector<3x128xf32>
    %8 = arith.maximumf %6, %7 : vector<3x128xf32>
    %9 = arith.mulf %4, %4 : vector<3x128xf32>
    %10 = arith.mulf %8, %8 : vector<3x128xf32>
    %11 = arith.subf %10, %9 : vector<3x128xf32>
    %12 = arith.mulf %3, %11 : vector<3x128xf32>
    %13 = arith.addf %9, %12 : vector<3x128xf32>
    %c0_5 = arith.constant 0 : index
    %c0_6 = arith.constant 0 : index
    %14 = vector.load %arg3[%c0_5, %c0_6] : memref<1x128xf32, #tpu.memory_space<vmem>>, vector<1x128xf32>
    %cst_7 = arith.constant dense<0.000000e+00> : vector<128xf32>
    %15 = vector.multi_reduction <add>, %13, %cst_7 [0] : vector<3x128xf32> to vector<128xf32>
    %16 = vector.shape_cast %15 : vector<128xf32> to vector<1x128xf32>
    %17 = arith.addf %14, %16 : vector<1x128xf32>
    %c0_8 = arith.constant 0 : index
    %c0_9 = arith.constant 0 : index
    %18 = vector.load %arg3[%c0_8, %c0_9] : memref<1x128xf32, #tpu.memory_space<vmem>>, vector<1x128xf32>
    tpu.vector_store %arg3[%c0_8, %c0_9], %17 {strides = array<i32>} : memref<1x128xf32, #tpu.memory_space<vmem>>, vector<1x128xf32>,
    return
  }
  func.func @transform_0(%arg0: i32) -> (i32, i32) {
    %c0_i32 = arith.constant 0 : i32
    %c0_i32_0 = arith.constant 0 : i32
    return %arg0, %c0_i32 : i32, i32
  }
  func.func @transform_1(%arg0: i32) -> (i32, i32) {
    %c0_i32 = arith.constant 0 : i32
    %c0_i32_0 = arith.constant 0 : i32
    return %arg0, %c0_i32 : i32, i32
  }
  func.func @transform_2(%arg0: i32) -> (i32, i32) {
    %c0_i32 = arith.constant 0 : i32
    %c0_i32_0 = arith.constant 0 : i32
    %c0_i32_1 = arith.constant 0 : i32
    return %c0_i32, %c0_i32_0 : i32, i32
  }
}

</mosaic_0001>

<llo_original>
// kernel: tpu_custom_call.1
$region0: #{tpu_custom_call.1}
  #allocation0 [shape = 'u32[]', space=smem, size = 0x4, offset = 0x4, fixed_abs, tag = 'smem constant byte address 0x4 - core index']
  #allocation1 [shape = 'u32[144,128]{1,0:T(1,128)}', space=vmem, size = 0x12000, scoped, tag = 'internal scratch']
  %s0 = inlined_call_operand.hbm [shape: f32[3,128], index: 0, kind: input, shape index: {}]
  %s1 = inlined_call_operand.hbm [shape: f32[3,128], index: 1, kind: input, shape index: {}]
  %s2 = inlined_call_operand.hbm [shape: f32[1,128], index: 2, kind: output, shape index: {}]
  %s3 = sld [smem:[#allocation0]]
  $region30: #{tpu_custom_call.1} parent=0
    _
  %s5 = ssub.s32 1, %s3
  %s6 = scalar_select 0, %s5, %s3
  $region1: #{tpu_custom_call.1} parent=0
    #allocation2 [shape = 'u8[2048]{0}', space=vmem, size = 0x800, scoped, tag = 'input window, operand 0, single buffered']
    #allocation3 [shape = 's32[1]{0}', space=sflag, size = 0x4, scoped, tag = 'scoped memory for tpu_custom_call.1']
    #allocation4 [shape = 's32[1]{0}', space=sflag, size = 0x4, scoped, tag = 'scoped memory for tpu_custom_call.1']
    #allocation5 [shape = 'u8[2048]{0}', space=vmem, size = 0x800, scoped, tag = 'input window, operand 1, single buffered']
    #allocation6 [shape = 's32[1]{0}', space=sflag, size = 0x4, scoped, tag = 'scoped memory for tpu_custom_call.1']
    #allocation7 [shape = 'u8[512]{0}', space=vmem, size = 0x400, scoped, tag = 'output window, operand 0, single buffered']
    %7 = vsyncpa [#allocation3], 0
    %8 = vsyncpa [#allocation6], 0
    %9 = vsyncpa [#allocation4], 0
    // Predicated region
    $region2: #{tpu_custom_call.1} parent=1 // pred_check
      _
    $region3: #{tpu_custom_call.1} parent=1 // pred_check_branch
      %11 = sbr.rel (0) target = $region5
    $region4: #{tpu_custom_call.1} parent=1 // pred_region
      %s13 = ssub.s32 64, 64
      %14 = vsyncadd [#allocation3], %s13
      %s16 = sshll.u32 [#allocation2], 4
      %s17 = int_to_ptr.vmem [resolvable:$true] %s16
      %19 = dma.hbm_to_vmem [thread:$0]  %s0, 64, %s17, [#allocation3]
    $region5: #{tpu_custom_call.1} parent=1 // pred_fallthru
      _
    // Predicated region
    $region6: #{tpu_custom_call.1} parent=1 // pred_check
      _
    $region7: #{tpu_custom_call.1} parent=1 // pred_check_branch
      %21 = sbr.rel (0) target = $region9
    $region8: #{tpu_custom_call.1} parent=1 // pred_region
      %s23 = ssub.s32 64, 64
      %24 = vsyncadd [#allocation6], %s23
      %s26 = sshll.u32 [#allocation5], 4
      %s27 = int_to_ptr.vmem [resolvable:$true] %s26
      %29 = dma.hbm_to_vmem [thread:$0]  %s1, 64, %s27, [#allocation6]
    $region9: #{tpu_custom_call.1} parent=1 // pred_fallthru
      _
    // Predicated region
    $region10: #{tpu_custom_call.1} parent=1 // pred_check
      _
    $region11: #{tpu_custom_call.1} parent=1 // pred_check_branch
      %31 = sbr.rel (0) target = $region13
    $region12: #{tpu_custom_call.1} parent=1 // pred_region
      %32 = dma.done [#allocation3], 64
    $region13: #{tpu_custom_call.1} parent=1 // pred_fallthru
      _
    // Predicated region
    $region14: #{tpu_custom_call.1} parent=1 // pred_check
      _
    $region15: #{tpu_custom_call.1} parent=1 // pred_check_branch
      %34 = sbr.rel (0) target = $region17
    $region16: #{tpu_custom_call.1} parent=1 // pred_region
      %35 = dma.done [#allocation6], 64
    $region17: #{tpu_custom_call.1} parent=1 // pred_fallthru
      _
    %p36 = scmp.eq.s32.totalorder 0, 0
    // Predicated region
    $region18: #{tpu_custom_call.1} parent=1 // pred_check
      %p37 = pneg %p36
    $region19: #{tpu_custom_call.1} parent=1 // pred_check_branch
      %39 = sbr.rel (%p37) target = $region21
    $region20: #{tpu_custom_call.1} parent=1 // pred_region
      %40 = vst [vmem:[#allocation7] sm:$0x1] 0.0
    $region21: #{tpu_custom_call.1} parent=1 // pred_fallthru
      _
    %v41 = vld [vmem:[#allocation2] sm:$0x7]
    %v42 = vld [vmem:[#allocation5] sm:$0x7]
    %v43 = vsub.f32 1.0, %v42
    %v44 = vmax.f32 %v43, 0.0
    %v45 = vmul.f32 %v42, %v42
    %v46 = vmul.f32 %v44, %v44
    %v47 = vsub.f32 %v46, %v45
    %v48 = vmul.f32 %v41, %v47
    %v49 = vadd.f32 %v45, %v48
    %v50 = vld [vmem:[#allocation7] sm:$0x1]
    %vm51 = vcmask 1042432
    %v52 = vsel %vm51, %v49, 0.0
    %v53 = vrot.slane %v52, 4
    %v54 = vadd.f32 %v52, %v53
    %v55 = vrot.slane %v54, 2
    %v56 = vadd.f32 %v54, %v55
    %v57 = vrot.slane %v56, 1
    %v58 = vadd.f32 %v56, %v57
    %v59 = vadd.f32 %v50, %v58
    %60 = vst [vmem:[#allocation7] sm:$0x1] %v59
    // Predicated region
    $region22: #{tpu_custom_call.1} parent=1 // pred_check
      _
    $region23: #{tpu_custom_call.1} parent=1 // pred_check_branch
      %62 = sbr.rel (0) target = $region25
    $region24: #{tpu_custom_call.1} parent=1 // pred_region
      %s64 = ssub.s32 16, 16
      %65 = vsyncadd [#allocation4], %s64
      %s67 = sshll.u32 [#allocation7], 4
      %s68 = int_to_ptr.vmem [resolvable:$true] %s67
      %70 = dma.vmem_to_hbm [thread:$0]  %s68, 16, %s2, [#allocation4]
    $region25: #{tpu_custom_call.1} parent=1 // pred_fallthru
      _
    // Predicated region
    $region26: #{tpu_custom_call.1} parent=1 // pred_check
      _
    $region27: #{tpu_custom_call.1} parent=1 // pred_check_branch
      %72 = sbr.rel (0) target = $region29
    $region28: #{tpu_custom_call.1} parent=1 // pred_region
      %73 = dma.done [#allocation4], 16
    $region29: #{tpu_custom_call.1} parent=1 // pred_fallthru
      _
    %74 = vsyncpa [#allocation3], 1
    %75 = vsyncpa [#allocation6], 1
    %76 = vsyncpa [#allocation4], 1

</llo_original>
